<compile_context>
chip_gen: v5e
topology: v5e:2x2
jax: 0.10.0
libtpu: 0.0.40
codegen_flags: <defaults>
</compile_context>

<pallas_src>
import functools

import jax
import jax.numpy as jnp
from jax.experimental import pallas as pl
from jax.experimental.pallas import tpu as pltpu

LANE = 128
SUBLANE = 8
_NEG_INF = -1e9
_DEFAULT_ROW_TILE = 1024   # 512-1024 ~ HBM roofline; keep a multiple of 8.


def _round_up(x, m):
    return ((x + m - 1) // m) * m


def _tile_rows(n, row_tile):
    """Pick (padded_rows, row_tile) for the N = B*T dimension."""
    row_tile = max(SUBLANE, _round_up(row_tile, SUBLANE))
    if n > row_tile:
        n_pad = _round_up(n, row_tile)
        tn = row_tile
    else:
        n_pad = _round_up(n, SUBLANE)
        tn = n_pad
    return n_pad, tn


def pad_emb_table(emb_table):
    """Pad the (V, V) table to (Vp, Vp), Vp a multiple of 128.

    Padded columns get -1e9 so they vanish from every log-sum-exp / softmax;
    padded rows are never selected (token ids < V).  Call this ONCE per set of
    weights and reuse the result (keeps table padding off the per-step path).
    """
    v = emb_table.shape[0]
    vp = _round_up(v, LANE)
    padded = jnp.full((vp, vp), _NEG_INF, dtype=jnp.float32)
    padded = padded.at[:v, :v].set(emb_table.astype(jnp.float32))
    return padded, v, vp


def _cost(n_pad, vp, *, with_logits, with_ce):
    return pl.CostEstimate(
        flops=int(2 * n_pad * vp * vp),
        transcendentals=int(n_pad * vp) if with_ce else 0,
        bytes_accessed=int(vp * vp * 4 + n_pad * 2 * 4
                           + (n_pad * vp * 4 if with_logits else 0)),
    )


# ---------------------------------------------------------------------------
# Kernels
# ---------------------------------------------------------------------------

def _lookup_and_ce(it_ref, emb_ref, vp):
    """Shared body: one-hot embedding lookup + masked cross-entropy partial."""
    tn = it_ref.shape[0]
    it = it_ref[...]                                           # (TN, 2) int32
    idx = it[:, 0:1]                                           # (TN, 1)
    tgt = it[:, 1:2]                                           # (TN, 1)
    lane_ids = jax.lax.broadcasted_iota(jnp.int32, (tn, vp), 1)

    # Embedding lookup as one-hot @ table (exact in f32).
    onehot = (idx == lane_ids).astype(jnp.float32)
    logits = jnp.dot(onehot, emb_ref[...].astype(jnp.float32),
                     preferred_element_type=jnp.float32)       # (TN, Vp)

    # Numerically stable cross entropy; padded rows carry tgt == -1 and are
    # masked out.  (An out-of-range target >= V would pick a -1e9 padded
    # logit; inputs are assumed valid, matching F.cross_entropy.)
    tgt_logit = jnp.sum(jnp.where(tgt == lane_ids, logits, 0.0),
                        axis=-1, keepdims=True)                # (TN, 1)
    row_max = jnp.max(logits, axis=-1, keepdims=True)          # (TN, 1)
    lse = jnp.log(jnp.sum(jnp.exp(logits - row_max),
                          axis=-1, keepdims=True)) + row_max   # (TN, 1)
    valid = (tgt >= 0).astype(jnp.float32)
    partial = jnp.sum(valid * (lse - tgt_logit))               # scalar
    return logits, partial


def _loss_kernel(it_ref, emb_ref, logits_ref, part_ref):
    # it_ref:     (TN, 2)       int32   col 0 = idx (pads 0), col 1 = targets (pads -1)
    # emb_ref:    (Vp, Vp)      float32 padded table (grid-invariant block)
    # logits_ref: (TN, Vp)      float32 lane-dense logits tile
    # part_ref:   (1, 8, 128)   float32 this tile's partial loss (lane-padded)
    logits, partial = _lookup_and_ce(it_ref, emb_ref, logits_ref.shape[1])
    logits_ref[...] = logits
    part_ref[...] = jnp.full(part_ref.shape, partial, jnp.float32)


def _loss_only_kernel(it_ref, emb_ref, part_ref):
    # Training-step variant: never stores the (N, Vp) logits to HBM.
    _, partial = _lookup_and_ce(it_ref, emb_ref, emb_ref.shape[1])
    part_ref[...] = jnp.full(part_ref.shape, partial, jnp.float32)


def _logits_kernel(idx_ref, emb_ref, logits_ref):
    # Loss-free variant for the targets=None / generation path.  emb_ref may
    # be bf16 (generation-quality numerics); accumulation is always f32.
    tn, vp = logits_ref.shape
    lane_ids = jax.lax.broadcasted_iota(jnp.int32, (tn, vp), 1)
    onehot = (idx_ref[...] == lane_ids).astype(emb_ref.dtype)
    logits_ref[...] = jnp.dot(onehot, emb_ref[...],
                              preferred_element_type=jnp.float32)


# ---------------------------------------------------------------------------
# Wrappers (jitted; take the pre-padded table)
# ---------------------------------------------------------------------------

def _pack_idx_targets(idx, targets, n, n_pad):
    idx_flat = jnp.pad(idx.reshape(n).astype(jnp.int32), (0, n_pad - n),
                       constant_values=0)
    tgt_flat = jnp.pad(targets.reshape(n).astype(jnp.int32), (0, n_pad - n),
                       constant_values=-1)
    return jnp.stack([idx_flat, tgt_flat], axis=1)             # (n_pad, 2)


@functools.partial(jax.jit,
                   static_argnames=("vocab_size", "row_tile", "unpad_logits"))
def bigram_forward(idx, targets, emb_padded, *, vocab_size,
                   row_tile=_DEFAULT_ROW_TILE, unpad_logits=True):
    """Forward pass with targets.

    Returns (logits, scalar mean cross-entropy loss).  With unpad_logits=True
    the logits are (B*T, V) to match the PyTorch module; with False they stay
    lane-dense (n_pad, Vp) (padded columns are -1e9, safe for softmax) and the
    extra HBM slice pass is skipped.
    """
    b, t = idx.shape
    n = b * t
    vp = emb_padded.shape[0]
    n_pad, tn = _tile_rows(n, row_tile)
    num_tiles = n_pad // tn

    it = _pack_idx_targets(idx, targets, n, n_pad)

    logits_p, parts = pl.pallas_call(
        _loss_kernel,
        out_shape=(
            jax.ShapeDtypeStruct((n_pad, vp), jnp.float32),
            jax.ShapeDtypeStruct((num_tiles, SUBLANE, LANE), jnp.float32),
        ),
        grid_spec=pltpu.PrefetchScalarGridSpec(
            num_scalar_prefetch=0,
            grid=(num_tiles,),
            in_specs=[
                pl.BlockSpec((tn, 2), lambda i: (i, 0)),
                # Grid-invariant table block (64 KiB here).  TODO(synk): for
                # big vocabs single-buffer it / switch to the gather path.
                pl.BlockSpec((vp, vp), lambda i: (0, 0)),
            ],
            out_specs=(
                pl.BlockSpec((tn, vp), lambda i: (i, 0)),
                pl.BlockSpec((1, SUBLANE, LANE), lambda i: (i, 0, 0)),
            ),
        ),
        # Each step writes disjoint logits + partial-loss blocks, so the row
        # axis is parallel (megacore-shardable on v7x).
        compiler_params=pltpu.CompilerParams(
            dimension_semantics=("parallel",)),
        cost_estimate=_cost(n_pad, vp, with_logits=True, with_ce=True),
    )(it, emb_padded)

    loss = jnp.sum(parts[:, 0, 0]) / jnp.float32(n)
    if unpad_logits:
        logits = logits_p[:n, :vocab_size]
    else:
        logits = logits_p
    return logits, loss


@functools.partial(jax.jit, static_argnames=("row_tile",))
def bigram_loss(idx, targets, emb_padded, *, row_tile=_DEFAULT_ROW_TILE):
    """Loss-only forward (logits never written to HBM)."""
    b, t = idx.shape
    n = b * t
    vp = emb_padded.shape[0]
    n_pad, tn = _tile_rows(n, row_tile)
    num_tiles = n_pad // tn

    it = _pack_idx_targets(idx, targets, n, n_pad)

    parts = pl.pallas_call(
        _loss_only_kernel,
        out_shape=jax.ShapeDtypeStruct((num_tiles, SUBLANE, LANE), jnp.float32),
        grid_spec=pltpu.PrefetchScalarGridSpec(
            num_scalar_prefetch=0,
            grid=(num_tiles,),
            in_specs=[
                pl.BlockSpec((tn, 2), lambda i: (i, 0)),
                pl.BlockSpec((vp, vp), lambda i: (0, 0)),
            ],
            out_specs=pl.BlockSpec((1, SUBLANE, LANE), lambda i: (i, 0, 0)),
        ),
        compiler_params=pltpu.CompilerParams(
            dimension_semantics=("parallel",)),
        cost_estimate=_cost(n_pad, vp, with_logits=False, with_ce=True),
    )(it, emb_padded)

    return jnp.sum(parts[:, 0, 0]) / jnp.float32(n)


@functools.partial(jax.jit, static_argnames=("vocab_size", "row_tile",
                                              "unpad_logits", "use_bf16"))
def bigram_forward_no_targets(idx, emb_padded, *, vocab_size,
                              row_tile=_DEFAULT_ROW_TILE, unpad_logits=True,
                              use_bf16=False):
    """Forward pass without targets: returns (logits, None).

    use_bf16=True feeds the MXU a bf16 table (2x MXU rate on v6e/v7x, f32
    accumulation) -- fine for sampling, not bit-identical to f32.
    """
    b, t = idx.shape
    n = b * t
    vp = emb_padded.shape[0]
    n_pad, tn = _tile_rows(n, row_tile)
    num_tiles = n_pad // tn

    emb = emb_padded.astype(jnp.bfloat16) if use_bf16 else emb_padded
    idx2 = jnp.pad(idx.reshape(n).astype(jnp.int32), (0, n_pad - n),
                   constant_values=0).reshape(n_pad, 1)

    logits_p = pl.pallas_call(
        _logits_kernel,
        out_shape=jax.ShapeDtypeStruct((n_pad, vp), jnp.float32),
        grid_spec=pltpu.PrefetchScalarGridSpec(
            num_scalar_prefetch=0,
            grid=(num_tiles,),
            in_specs=[
                pl.BlockSpec((tn, 1), lambda i: (i, 0)),
                pl.BlockSpec((vp, vp), lambda i: (0, 0)),
            ],
            out_specs=pl.BlockSpec((tn, vp), lambda i: (i, 0)),
        ),
        compiler_params=pltpu.CompilerParams(
            dimension_semantics=("parallel",)),
        cost_estimate=_cost(n_pad, vp, with_logits=True, with_ce=False),
    )(idx2, emb)

    if unpad_logits:
        logits = logits_p[:n, :vocab_size].reshape(b, t, vocab_size)
    else:
        logits = logits_p
    return logits, None


def reference_forward(idx, targets, emb_table):
    """Pure-JAX reference for validation."""
    b, t = idx.shape
    v = emb_table.shape[0]
    logits = emb_table[idx].reshape(b * t, v)
    lse = jax.nn.logsumexp(logits, axis=-1)
    tgt_logit = jnp.take_along_axis(
        logits, targets.reshape(-1, 1), axis=-1)[:, 0]
    loss = jnp.mean(lse - tgt_logit)
    return logits, loss


if __name__ == "__main__":
    vocab_size = 65   # e.g. tiny-Shakespeare character vocab
    B, T = 2, 8

    key = jax.random.PRNGKey(0)
    k_emb, k_idx, k_tgt = jax.random.split(key, 3)

    # nn.Embedding(vocab_size, vocab_size) init ~ N(0, 1).
    emb_table = jax.random.normal(k_emb, (vocab_size, vocab_size),
                                  dtype=jnp.float32)
    idx = jax.random.randint(k_idx, (B, T), 0, vocab_size, dtype=jnp.int32)
    targets = jax.random.randint(k_tgt, (B, T), 0, vocab_size, dtype=jnp.int32)

    # Pad the table once (hoisted out of the per-call / per-step path).
    emb_padded, v, vp = pad_emb_table(emb_table)
    emb_padded = jax.block_until_ready(emb_padded)

    ref_logits, ref_loss = reference_forward(idx, targets, emb_table)

    # Training-style call (with targets).
    logits, loss = bigram_forward(idx, targets, emb_padded,
                                  vocab_size=vocab_size)
    logits = jax.block_until_ready(logits)
    loss = jax.block_until_ready(loss)
    assert logits.shape == (B * T, vocab_size)
    assert jnp.allclose(logits, ref_logits, atol=1e-5)
    assert jnp.allclose(loss, ref_loss, atol=1e-5)

    # Loss-only training-step call (skips the logits HBM store entirely).
    loss_only = jax.block_until_ready(bigram_loss(idx, targets, emb_padded))
    assert jnp.allclose(loss_only, ref_loss, atol=1e-5)

    # Inference-style call (no targets), loss-free kernel.
    logits3, none_loss = bigram_forward_no_targets(idx, emb_padded,
                                                   vocab_size=vocab_size)
    logits3 = jax.block_until_ready(logits3)
    assert none_loss is None
    assert logits3.shape == (B, T, vocab_size)
    assert jnp.allclose(logits3.reshape(B * T, vocab_size), ref_logits,
                        atol=1e-5)

    # Lane-dense padded logits (no unpad slice) -- padded cols are -1e9.
    logits_pad, _ = bigram_forward_no_targets(idx, emb_padded,
                                              vocab_size=vocab_size,
                                              unpad_logits=False)
    logits_pad = jax.block_until_ready(logits_pad)
    assert logits_pad.shape[1] == vp
    assert jnp.allclose(logits_pad[:B * T, :vocab_size], ref_logits,
                        atol=1e-5)

    # bf16-table generation path (sampling-quality numerics).
    logits_bf16, _ = bigram_forward_no_targets(idx, emb_padded,
                                               vocab_size=vocab_size,
                                               use_bf16=True)
    logits_bf16 = jax.block_until_ready(logits_bf16)
    assert jnp.allclose(logits_bf16.reshape(B * T, vocab_size), ref_logits,
                        atol=5e-2)

    print("KERNEL_OK")
</pallas_src>

<mosaic_0001>
module attributes {stable_mosaic.version = 11 : i64} {
  func.func @_loss_kernel(%arg0: i32, %arg1: memref<16x2xi32, #tpu.memory_space<vmem>>, %arg2: memref<128x128xf32, #tpu.memory_space<vmem>>, %arg3: memref<16x128xf32, #tpu.memory_space<vmem>>, %arg4: memref<1x8x128xf32, #tpu.memory_space<vmem>>) attributes {dimension_semantics = [#tpu.dimension_semantics<parallel>], iteration_bounds = array<i64: 1>, scalar_prefetch = 0 : i64, scratch_operands = 0 : i64, tpu.core_type = #tpu.core_type<tc>, window_params = [{transform_indices = @transform_0, window_bounds = array<i64: 16, 2>}, {pipeline_mode = #tpu.pipeline_mode<synchronous>, transform_indices = @transform_1, window_bounds = array<i64: 128, 128>}, {transform_indices = @transform_2, window_bounds = array<i64: 16, 128>}, {transform_indices = @transform_3, window_bounds = array<i64: 1, 8, 128>}]} {
    %c0 = arith.constant 0 : index
    %c0_0 = arith.constant 0 : index
    %0 = vector.load %arg1[%c0, %c0_0] : memref<16x2xi32, #tpu.memory_space<vmem>>, vector<16x2xi32>
    %1 = vector.extract_strided_slice %0 {offsets = [0, 0], sizes = [16, 1], strides = [1, 1]} : vector<16x2xi32> to vector<16x1xi32>
    %2 = vector.extract_strided_slice %0 {offsets = [0, 1], sizes = [16, 1], strides = [1, 1]} : vector<16x2xi32> to vector<16x1xi32>
    %3 = tpu.iota {dimensions = array<i32: 1>} : vector<16x128xi32>
    %4 = vector.broadcast %1 : vector<16x1xi32> to vector<16x128xi32>
    %5 = arith.cmpi eq, %4, %3 : vector<16x128xi32>
    %6 = arith.extui %5 : vector<16x128xi1> to vector<16x128xi32>
    %7 = arith.sitofp %6 : vector<16x128xi32> to vector<16x128xf32>
    %c0_1 = arith.constant 0 : index
    %c0_2 = arith.constant 0 : index
    %8 = vector.load %arg2[%c0_1, %c0_2] : memref<128x128xf32, #tpu.memory_space<vmem>>, vector<128x128xf32>
    %cst = arith.constant dense<0.000000e+00> : vector<16x128xf32>
    %9 = tpu.matmul %7, %8, %cst {dimension_numbers = #tpu.dot_dimension_numbers<[1], [0], [0], [1], [0, 0, 1, 1], [], []>} : vector<16x128xf32>, vector<128x128xf32>, vector<16x128xf32> -> vector<16x128xf32>
    %10 = vector.broadcast %2 : vector<16x1xi32> to vector<16x128xi32>
    %11 = arith.cmpi eq, %10, %3 : vector<16x128xi32>
    %cst_3 = arith.constant 0.000000e+00 : f32
    %12 = vector.broadcast %cst_3 : f32 to vector<16x128xf32>
    %13 = arith.select %11, %9, %12 : vector<16x128xi1>, vector<16x128xf32>
    %cst_4 = arith.constant dense<0.000000e+00> : vector<16xf32>
    %14 = vector.multi_reduction <add>, %13, %cst_4 [1] : vector<16x128xf32> to vector<16xf32>
    %15 = vector.shape_cast %14 : vector<16xf32> to vector<16x1xf32>
    %cst_5 = arith.constant dense<0xFF800000> : vector<16xf32>
    %16 = vector.multi_reduction <maximumf>, %9, %cst_5 [1] : vector<16x128xf32> to vector<16xf32>
    %17 = vector.shape_cast %16 : vector<16xf32> to vector<16x1xf32>
    %18 = vector.broadcast %17 : vector<16x1xf32> to vector<16x128xf32>
    %19 = arith.subf %9, %18 : vector<16x128xf32>
    %20 = math.exp %19 : vector<16x128xf32>
    %cst_6 = arith.constant dense<0.000000e+00> : vector<16xf32>
    %21 = vector.multi_reduction <add>, %20, %cst_6 [1] : vector<16x128xf32> to vector<16xf32>
    %22 = vector.shape_cast %21 : vector<16xf32> to vector<16x1xf32>
    %23 = math.log %22 : vector<16x1xf32>
    %24 = arith.addf %23, %17 : vector<16x1xf32>
    %c0_i32 = arith.constant 0 : i32
    %25 = vector.broadcast %c0_i32 : i32 to vector<16x1xi32>
    %26 = arith.cmpi sge, %2, %25 : vector<16x1xi32>
    %27 = arith.extui %26 : vector<16x1xi1> to vector<16x1xi32>
    %28 = arith.sitofp %27 : vector<16x1xi32> to vector<16x1xf32>
    %29 = arith.subf %24, %15 : vector<16x1xf32>
    %30 = arith.mulf %28, %29 : vector<16x1xf32>
    %31 = vector.shape_cast %30 : vector<16x1xf32> to vector<1x16x1xf32>
    %cst_7 = arith.constant dense<0.000000e+00> : vector<1xf32>
    %32 = vector.multi_reduction <add>, %31, %cst_7 [1, 2] : vector<1x16x1xf32> to vector<1xf32>
    %33 = vector.shape_cast %32 : vector<1xf32> to vector<1x1x1xf32>
    %34 = vector.extract %33[0, 0, 0] : f32 from vector<1x1x1xf32>
    %c0_8 = arith.constant 0 : index
    %c0_9 = arith.constant 0 : index
    %35 = vector.load %arg3[%c0_8, %c0_9] : memref<16x128xf32, #tpu.memory_space<vmem>>, vector<16x128xf32>
    tpu.vector_store %arg3[%c0_8, %c0_9], %9 {strides = array<i32>} : memref<16x128xf32, #tpu.memory_space<vmem>>, vector<16x128xf32>,
    %36 = vector.broadcast %34 : f32 to vector<1x8x128xf32>
    %c0_10 = arith.constant 0 : index
    %c0_11 = arith.constant 0 : index
    %c0_12 = arith.constant 0 : index
    %37 = vector.load %arg4[%c0_10, %c0_11, %c0_12] : memref<1x8x128xf32, #tpu.memory_space<vmem>>, vector<1x8x128xf32>
    tpu.vector_store %arg4[%c0_10, %c0_11, %c0_12], %36 {strides = array<i32>} : memref<1x8x128xf32, #tpu.memory_space<vmem>>, vector<1x8x128xf32>,
    return
  }
  func.func @transform_0(%arg0: i32) -> (i32, i32) {
    %c0_i32 = arith.constant 0 : i32
    %c0_i32_0 = arith.constant 0 : i32
    return %arg0, %c0_i32 : i32, i32
  }
  func.func @transform_1(%arg0: i32) -> (i32, i32) {
    %c0_i32 = arith.constant 0 : i32
    %c0_i32_0 = arith.constant 0 : i32
    %c0_i32_1 = arith.constant 0 : i32
    return %c0_i32, %c0_i32_0 : i32, i32
  }
  func.func @transform_2(%arg0: i32) -> (i32, i32) {
    %c0_i32 = arith.constant 0 : i32
    %c0_i32_0 = arith.constant 0 : i32
    return %arg0, %c0_i32 : i32, i32
  }
  func.func @transform_3(%arg0: i32) -> (i32, i32, i32) {
    %c0_i32 = arith.constant 0 : i32
    %c0_i32_0 = arith.constant 0 : i32
    %c0_i32_1 = arith.constant 0 : i32
    return %arg0, %c0_i32, %c0_i32_0 : i32, i32, i32
  }
}

</mosaic_0001>

<llo_original>
// kernel: bigram_forward.1
$region0: #{bigram_forward.1}
  #allocation0 [shape = 'u32[]', space=smem, size = 0x4, offset = 0x4, fixed_abs, tag = 'smem constant byte address 0x4 - core index']
  #allocation1 [shape = 'u32[72,128]{1,0:T(1,128)}', space=vmem, size = 0x9000, scoped, tag = 'internal scratch']
  %s0 = inlined_call_operand.vmem [shape: s32[16,2], index: 0, kind: input, shape index: {}]
  %s1 = inlined_call_operand.hbm [shape: f32[128,128], index: 1, kind: input, shape index: {}]
  %s2 = inlined_call_operand.hbm [shape: f32[16,128], index: 2, kind: output, shape index: {0}]
  %s3 = inlined_call_operand.vmem [shape: f32[1,8,128], index: 3, kind: output, shape index: {1}]
  %4 = xla_tuple %s2, %s3
  %s5 = sld [smem:[#allocation0]]
  $region30: #{bigram_forward.1} parent=0
    _
  %s7 = ssub.s32 1, %s5
  %s8 = scalar_select 0, %s7, %s5
  $region1: #{bigram_forward.1} parent=0
    #allocation2 [shape = 'u8[65536]{0}', space=vmem, size = 0x10000, scoped, tag = 'input window, operand 1, single buffered']
    #allocation3 [shape = 's32[1]{0}', space=sflag, size = 0x4, scoped, tag = 'scoped memory for bigram_forward.1']
    #allocation4 [shape = 's32[1]{0}', space=sflag, size = 0x4, scoped, tag = 'scoped memory for bigram_forward.1']
    #allocation5 [shape = 'u8[8192]{0}', space=vmem, size = 0x2000, scoped, tag = 'output window, operand 0, single buffered']
    %9 = vsyncpa [#allocation3], 0
    %10 = vsyncpa [#allocation4], 0
    // Predicated region
    $region2: #{bigram_forward.1} parent=1 // pred_check
      _
    $region3: #{bigram_forward.1} parent=1 // pred_check_branch
      %12 = sbr.rel (0) target = $region5
    $region4: #{bigram_forward.1} parent=1 // pred_region
      _
    $region5: #{bigram_forward.1} parent=1 // pred_fallthru
      _
    // Predicated region
    $region6: #{bigram_forward.1} parent=1 // pred_check
      _
    $region7: #{bigram_forward.1} parent=1 // pred_check_branch
      %14 = sbr.rel (0) target = $region9
    $region8: #{bigram_forward.1} parent=1 // pred_region
      %16 = vsyncadd [#allocation3], 0
      %s17 = sshll.u32 %s1, 4
      %s18 = int_to_ptr.hbm [resolvable:$true] %s17
      %s19 = sshll.u32 [#allocation2], 4
      %s20 = int_to_ptr.vmem [resolvable:$true] %s19
      %25 = dma.hbm_to_vmem [thread:$0]  %s18, 2048, %s20, [#allocation3], 128, 128, 8
    $region9: #{bigram_forward.1} parent=1 // pred_fallthru
      _
    // Predicated region
    $region10: #{bigram_forward.1} parent=1 // pred_check
      _
    $region11: #{bigram_forward.1} parent=1 // pred_check_branch
      %27 = sbr.rel (0) target = $region13
    $region12: #{bigram_forward.1} parent=1 // pred_region
      %29 = dma.done [#allocation3], 2048
    $region13: #{bigram_forward.1} parent=1 // pred_fallthru
      _
    %v30 = vld [vmem:[%s0] sm:$0xff]
    %v31 = vld [vmem:[%s0 + $0x8] sm:$0xff]
    %v32 = vlaneseq
    %v33 = vand.u32 %v32, 127
    %34 = vset.pattern.permute.xlu0 0
    %35 = vperm.xlu0 %34, %v30
    %v36 = vpop.permute.xlu0 %35
    %37 = vset.pattern.permute.xlu0 0
    %38 = vperm.xlu0 %37, %v31
    %v39 = vpop.permute.xlu0 %38
    %vm40 = vcmp.eq.s32.totalorder %v36, %v33
    %vm41 = vcmp.eq.s32.totalorder %v39, %v33
    %v42 = vsel %vm40, 1, 0
    %v43 = vsel %vm41, 1, 0
    %v44 = vcvt.s32.f32 %v42
    %v45 = vcvt.s32.f32 %v43
    %v46 = vld [vmem:[#allocation2] sm:$0xff]
    %v47 = vld [vmem:[#allocation2 + $0x8] sm:$0xff]
    %v48 = vld [vmem:[#allocation2 + $0x10] sm:$0xff]
    %v49 = vld [vmem:[#allocation2 + $0x18] sm:$0xff]
    %v50 = vld [vmem:[#allocation2 + $0x20] sm:$0xff]
    %v51 = vld [vmem:[#allocation2 + $0x28] sm:$0xff]
    %v52 = vld [vmem:[#allocation2 + $0x30] sm:$0xff]
    %v53 = vld [vmem:[#allocation2 + $0x38] sm:$0xff]
    %v54 = vld [vmem:[#allocation2 + $0x40] sm:$0xff]
    %v55 = vld [vmem:[#allocation2 + $0x48] sm:$0xff]
    %v56 = vld [vmem:[#allocation2 + $0x50] sm:$0xff]
    %v57 = vld [vmem:[#allocation2 + $0x58] sm:$0xff]
    %v58 = vld [vmem:[#allocation2 + $0x60] sm:$0xff]
    %v59 = vld [vmem:[#allocation2 + $0x68] sm:$0xff]
    %v60 = vld [vmem:[#allocation2 + $0x70] sm:$0xff]
    %v61 = vld [vmem:[#allocation2 + $0x78] sm:$0xff]
    %62 = vmatpush.msra.mxu0 %v61
    %63 = vmatpush.msra.mxu0 %v60
    %64 = vmatpush.msra.mxu0 %v59
    %65 = vmatpush.msra.mxu0 %v58
    %66 = vmatpush.msra.mxu0 %v57
    %67 = vmatpush.msra.mxu0 %v56
    %68 = vmatpush.msra.mxu0 %v55
    %69 = vmatpush.msra.mxu0 %v54
    %70 = vmatpush.msra.mxu0 %v53
    %71 = vmatpush.msra.mxu0 %v52
    %72 = vmatpush.msra.mxu0 %v51
    %73 = vmatpush.msra.mxu0 %v50
    %74 = vmatpush.msra.mxu0 %v49
    %75 = vmatpush.msra.mxu0 %v48
    %76 = vmatpush.msra.mxu0 %v47
    %77 = vmatpush.msra.mxu0 %v46
    %78 = vmatmul.f32.gmra.mxu0 %v44
    %v79 = vpop.f32.mrf.mxu0
    %v80 = vadd.f32 0.0, %v79
    %81 = vmatmul.f32.gmra.mxu0 %v45
    %v82 = vpop.f32.mrf.mxu0
    %v83 = vadd.f32 0.0, %v82
    %84 = vdwg.mxu0
    %85 = vset.pattern.permute.xlu0 1
    %86 = vperm.xlu0 %85, %v30
    %v87 = vpop.permute.xlu0 %86
    %88 = vset.pattern.permute.xlu0 1
    %89 = vperm.xlu0 %88, %v31
    %v90 = vpop.permute.xlu0 %89
    %vm91 = vcmp.eq.s32.totalorder %v87, %v33
    %vm92 = vcmp.eq.s32.totalorder %v90, %v33
    %v93 = vsel %vm91, %v80, 0.0
    %v94 = vsel %vm92, %v83, 0.0
    %95 = vadd.xlane.f32.xlu0 %v93
    %v96 = vpop.xlane.xlu0 %95
    %97 = vadd.xlane.f32.xlu0 %v94
    %v98 = vpop.xlane.xlu0 %97
    %99 = vmax.xlane.f32.xlu0 %v80
    %v100 = vpop.xlane.xlu0 %99
    %101 = vmax.xlane.f32.xlu0 %v83
    %v102 = vpop.xlane.xlu0 %101
    %v103 = vsub.f32 %v80, %v100
    %v104 = vsub.f32 %v83, %v102
    %v105 = vmul.f32 %v103, 1.442695
    %v106 = vpow.pop %v105
    %v107 = vmul.f32 %v104, 1.442695
    %v108 = vpow.pop %v107
    %109 = vadd.xlane.f32.xlu0 %v106
    %v110 = vpop.xlane.xlu0 %109
    %111 = vadd.xlane.f32.xlu0 %v108
    %v112 = vpop.xlane.xlu0 %111
    %v113 = vlog2.pop %v110
    %v114 = vmul.f32 %v113, 0.6931472
    %v115 = vlog2.pop %v112
    %v116 = vmul.f32 %v115, 0.6931472
    %v117 = vadd.f32 %v114, %v100
    %v118 = vadd.f32 %v116, %v102
    %vm119 = vcmp.ge.s32.totalorder %v30, 0
    %vm120 = vcmp.ge.s32.totalorder %v31, 0
    %v121 = vsel %vm119, 1, 0
    %v122 = vsel %vm120, 1, 0
    %v123 = vcvt.s32.f32 %v121
    %v124 = vcvt.s32.f32 %v122
    %v125 = vsub.f32 %v117, %v96
    %v126 = vsub.f32 %v118, %v98
    %v127 = vmul.f32 %v123, %v125
    %v128 = vmul.f32 %v124, %v126
    %131 = vrot.lane.b32.xlu0 %v127, 127
    %v132 = vpop.permute.xlu0 %131
    %133 = vrot.lane.b32.xlu0 %v128, 127
    %v134 = vpop.permute.xlu0 %133
    %vm137 = vcmask 7168
    %v138 = vsel %vm137, %v132, 0.0
    %v139 = vsel %vm137, %v134, 0.0
    %v140 = vadd.f32 %v138, %v139
    %141 = vadd.xlane.f32.xlu0 %v140
    %v142 = vpop.xlane.xlu0 %141
    %v143 = vrot.slane %v142, 4
    %v144 = vadd.f32 %v142, %v143
    %v145 = vrot.slane %v144, 2
    %v146 = vadd.f32 %v144, %v145
    %v147 = vrot.slane %v146, 1
    %v148 = vadd.f32 %v146, %v147
    %s149 = vtos %v148
    %150 = vst [vmem:[#allocation5] sm:$0xff] %v80
    %151 = vst [vmem:[#allocation5 + $0x8] sm:$0xff] %v83
    %v152 = vstv %s149
    %153 = vst [vmem:[%s3] sm:$0xff] %v152
    // Predicated region
    $region14: #{bigram_forward.1} parent=1 // pred_check
      _
    $region15: #{bigram_forward.1} parent=1 // pred_check_branch
      %155 = sbr.rel (0) target = $region17
    $region16: #{bigram_forward.1} parent=1 // pred_region
      %157 = vsyncadd [#allocation4], 0
      %s158 = sshll.u32 [#allocation5], 4
      %s159 = int_to_ptr.vmem [resolvable:$true] %s158
      %s160 = sshll.u32 %s2, 4
      %s161 = int_to_ptr.hbm [resolvable:$true] %s160
      %166 = dma.vmem_to_hbm [thread:$0]  %s159, 256, %s161, [#allocation4], 128, 128, 8
    $region17: #{bigram_forward.1} parent=1 // pred_fallthru
      _
    // Predicated region
    $region18: #{bigram_forward.1} parent=1 // pred_check
      _
    $region19: #{bigram_forward.1} parent=1 // pred_check_branch
      %168 = sbr.rel (0) target = $region21
    $region20: #{bigram_forward.1} parent=1 // pred_region
      _
    $region21: #{bigram_forward.1} parent=1 // pred_fallthru
      _
    // Predicated region
    $region22: #{bigram_forward.1} parent=1 // pred_check
      _
    $region23: #{bigram_forward.1} parent=1 // pred_check_branch
      %170 = sbr.rel (0) target = $region25
    $region24: #{bigram_forward.1} parent=1 // pred_region
      %172 = dma.done [#allocation4], 256
    $region25: #{bigram_forward.1} parent=1 // pred_fallthru
      _
    // Predicated region
    $region26: #{bigram_forward.1} parent=1 // pred_check
      _
    $region27: #{bigram_forward.1} parent=1 // pred_check_branch
      %174 = sbr.rel (0) target = $region29
    $region28: #{bigram_forward.1} parent=1 // pred_region
      _
    $region29: #{bigram_forward.1} parent=1 // pred_fallthru
      _
    %175 = vsyncpa [#allocation3], 1
    %176 = vsyncpa [#allocation4], 1

</llo_original>
